<compile_context>
chip_gen: v7x
topology: tpu7x:2x2x1
jax: 0.10.0
libtpu: 0.0.40
codegen_flags: <defaults>
</compile_context>

<pallas_src>
import jax
import jax.numpy as jnp
from jax.experimental import pallas as pl
from jax.experimental.pallas import tpu as pltpu


def _cdiv(a, b):
    return -(-a // b)


def _sublane_multiple(dtype):
    # Minimum second-minor tile multiple: 8 for 32-bit, 16 for 16-bit, 32 for 8-bit.
    bits = jnp.dtype(dtype).itemsize * 8
    return max(8, 256 // bits)


def _device_config():
    kind = ""
    try:
        kind = jax.devices()[0].device_kind.lower()
    except Exception:
        pass
    if "v7" in kind:
        # 2 TCs/chip, 64 MiB physical VMEM: large blocks with headroom, balance the cores.
        return dict(target_out_bytes=6 << 20, vmem_limit=48 << 20, two_tc=True)
    if "v6" in kind or ("v5" in kind and ("lite" in kind or "v5e" in kind)):
        # 1 TC/chip, 128 MiB physical VMEM: biggest blocks, no grid splitting needed.
        return dict(target_out_bytes=8 << 20, vmem_limit=64 << 20, two_tc=False)
    # Unknown / other (v4, v5p, ...): conservative sizes, assume a megacore chip.
    return dict(target_out_bytes=4 << 20, vmem_limit=32 << 20, two_tc=True)


def _pick_tiles(B, rows, lanes, itemsize, sub, cfg):
    """Choose (batch_tile, row_tile); the lane dim is always taken in full.

    Each grid step targets ~cfg['target_out_bytes'] of output (input block is 2x that),
    which amortizes the ~0.35 us fixed per-step overhead while the double-buffered
    VMEM footprint (~6x target) stays inside the scoped limit.
    """
    target = cfg["target_out_bytes"]
    two_tc = cfg["two_tc"]
    row_bytes = lanes * itemsize
    per_batch_out = rows * row_bytes

    if per_batch_out <= target:
        # Fold whole batches into each step.
        bt = max(1, min(B, target // max(per_batch_out, 1)))
        if two_tc and B >= 2:
            # 2-TC chips share the grid: want >=2 steps along B, preferably an even count.
            bt = min(bt, max(1, B // 2))
            while bt > 1 and _cdiv(B, bt) % 2 != 0:
                bt -= 1
        rt = rows
        if two_tc and B == 1 and rows > sub:
            # Single batch on a 2-TC chip: split rows so both cores get work.
            rt = max(sub, (_cdiv(rows, 2) // sub) * sub)
        return bt, rt

    # A single batch already exceeds the target block: bt = 1, tile rows in sublane
    # multiples (the cdiv grid pads the edge block, which is safe for elementwise).
    if rows <= sub:
        return 1, rows
    rt = max(sub, (min(rows, target // max(row_bytes, 1)) // sub) * sub)
    return 1, min(rt, rows)


def _mag_kernel(x_ref, o_ref):
    # x_ref block: (bt, 2, rt, lanes) — one contiguous DMA covering real+imag.
    # o_ref block: (bt, rt, lanes).
    # Compute in f32 so bf16/fp16 inputs neither overflow nor lose mantissa before sqrt.
    real = x_ref[:, 0, :, :].astype(jnp.float32)
    imag = x_ref[:, 1, :, :].astype(jnp.float32)
    o_ref[...] = jnp.sqrt(real * real + imag * imag).astype(o_ref.dtype)


def n2ft_to_mag(n2ft):
    B, C, F, T = n2ft.shape
    assert C == 2, "expected channel dim of size 2 (real, imag)"
    dtype = n2ft.dtype
    itemsize = jnp.dtype(dtype).itemsize
    sub = _sublane_multiple(dtype)
    cfg = _device_config()

    L = F * T
    flat = (L % 128) == 0
    if flat:
        # Free contiguous reshape: lane-dense 128-wide rows irrespective of T, and the
        # row axis can be tiled in sublane multiples with no divisor constraint on F.
        rows, lanes = L // 128, 128
        x = n2ft.reshape(B, 2, rows, lanes)
    else:
        # Full-T blocks (lane dim equals the full array dim, always a legal block shape).
        rows, lanes = F, T
        x = n2ft

    bt, rt = _pick_tiles(B, rows, lanes, itemsize, sub, cfg)
    grid = (_cdiv(B, bt), _cdiv(rows, rt))

    # Advisory cost hint: bytes moved dominate; ~0 FLOPs.
    cost = pl.CostEstimate(
        flops=3 * B * L,            # 2 mul + 1 add per output element
        transcendentals=B * L,      # sqrt
        bytes_accessed=3 * B * L * itemsize,
    )

    out = pl.pallas_call(
        _mag_kernel,
        out_shape=jax.ShapeDtypeStruct((B, rows, lanes), dtype),
        grid_spec=pltpu.PrefetchScalarGridSpec(
            num_scalar_prefetch=0,
            grid=grid,
            # One contiguous (bt, 2, rt, lanes) input block per step; the channel slice
            # inside the kernel is a free static sub-view.
            in_specs=[pl.BlockSpec((bt, 2, rt, lanes), lambda b, r: (b, 0, r, 0))],
            out_specs=pl.BlockSpec((bt, rt, lanes), lambda b, r: (b, r, 0)),
        ),
        compiler_params=pltpu.CompilerParams(
            dimension_semantics=("parallel", "parallel"),
            vmem_limit_bytes=cfg["vmem_limit"],
        ),
        cost_estimate=cost,
    )(x)

    return out.reshape(B, F, T) if flat else out


if __name__ == "__main__":
    key = jax.random.PRNGKey(0)
    k1, k2, k3 = jax.random.split(key, 3)

    # Main check: batch=8, 2 channels (real/imag), F=16 bins, T=128 frames (flat path).
    B, F, T = 8, 16, 128
    n2ft = jax.random.normal(k1, (B, 2, F, T), dtype=jnp.float32)
    out = jax.block_until_ready(n2ft_to_mag(n2ft))
    ref = jnp.sqrt(n2ft[:, 0, :, :] ** 2 + n2ft[:, 1, :, :] ** 2)
    assert out.shape == (B, F, T)
    assert jnp.allclose(out, ref, atol=1e-6), "f32 mismatch vs reference"

    # Awkward shape (odd B, tiny F, T not a multiple of 128): exercises the full-T
    # fallback path and the cdiv-based grid.
    B2, F2, T2 = 3, 5, 96
    n2ft2 = jax.random.normal(k2, (B2, 2, F2, T2), dtype=jnp.float32)
    out2 = jax.block_until_ready(n2ft_to_mag(n2ft2))
    ref2 = jnp.sqrt(n2ft2[:, 0, :, :] ** 2 + n2ft2[:, 1, :, :] ** 2)
    assert out2.shape == (B2, F2, T2)
    assert jnp.allclose(out2, ref2, atol=1e-6), "fallback-path mismatch vs reference"

    # bf16 check: exercises the dtype-aware sublane multiple and f32 compute path.
    n2ft_bf = jax.random.normal(k3, (2, 2, 16, 128), dtype=jnp.float32).astype(jnp.bfloat16)
    out_bf = jax.block_until_ready(n2ft_to_mag(n2ft_bf))
    xf = n2ft_bf.astype(jnp.float32)
    ref_bf = jnp.sqrt(xf[:, 0, :, :] ** 2 + xf[:, 1, :, :] ** 2)
    assert out_bf.shape == (2, 16, 128)
    assert jnp.allclose(out_bf.astype(jnp.float32), ref_bf, atol=3e-2, rtol=3e-2), \
        "bf16 mismatch vs reference"

    print("KERNEL_OK")
</pallas_src>

<mosaic_0001>
module attributes {stable_mosaic.version = 11 : i64} {
  func.func @_mag_kernel(%arg0: i32, %arg1: i32, %arg2: memref<4x2x16x128xf32, #tpu.memory_space<vmem>>, %arg3: memref<4x16x128xf32, #tpu.memory_space<vmem>>) attributes {dimension_semantics = [#tpu.dimension_semantics<parallel>, #tpu.dimension_semantics<parallel>], iteration_bounds = array<i64: 2, 1>, scalar_prefetch = 0 : i64, scratch_operands = 0 : i64, tpu.core_type = #tpu.core_type<tc>, window_params = [{transform_indices = @transform_0, window_bounds = array<i64: 4, 2, 16, 128>}, {transform_indices = @transform_1, window_bounds = array<i64: 4, 16, 128>}]} {
    %c0 = arith.constant 0 : index
    %c0_0 = arith.constant 0 : index
    %c0_1 = arith.constant 0 : index
    %c0_2 = arith.constant 0 : index
    %0 = vector.load %arg2[%c0, %c0_0, %c0_1, %c0_2] : memref<4x2x16x128xf32, #tpu.memory_space<vmem>>, vector<4x1x16x128xf32>
    %1 = vector.shape_cast %0 : vector<4x1x16x128xf32> to vector<4x16x128xf32>
    %c0_3 = arith.constant 0 : index
    %c1 = arith.constant 1 : index
    %c0_4 = arith.constant 0 : index
    %c0_5 = arith.constant 0 : index
    %2 = vector.load %arg2[%c0_3, %c1, %c0_4, %c0_5] : memref<4x2x16x128xf32, #tpu.memory_space<vmem>>, vector<4x1x16x128xf32>
    %3 = vector.shape_cast %2 : vector<4x1x16x128xf32> to vector<4x16x128xf32>
    %4 = arith.mulf %1, %1 : vector<4x16x128xf32>
    %5 = arith.mulf %3, %3 : vector<4x16x128xf32>
    %6 = arith.addf %4, %5 : vector<4x16x128xf32>
    %7 = math.sqrt %6 : vector<4x16x128xf32>
    %c0_6 = arith.constant 0 : index
    %c0_7 = arith.constant 0 : index
    %c0_8 = arith.constant 0 : index
    %8 = vector.load %arg3[%c0_6, %c0_7, %c0_8] : memref<4x16x128xf32, #tpu.memory_space<vmem>>, vector<4x16x128xf32>
    tpu.vector_store %arg3[%c0_6, %c0_7, %c0_8], %7 {strides = array<i32>} : memref<4x16x128xf32, #tpu.memory_space<vmem>>, vector<4x16x128xf32>,
    return
  }
  func.func @transform_0(%arg0: i32, %arg1: i32) -> (i32, i32, i32, i32) {
    %c0_i32 = arith.constant 0 : i32
    %c0_i32_0 = arith.constant 0 : i32
    %c0_i32_1 = arith.constant 0 : i32
    return %arg0, %c0_i32, %arg1, %c0_i32_0 : i32, i32, i32, i32
  }
  func.func @transform_1(%arg0: i32, %arg1: i32) -> (i32, i32, i32) {
    %c0_i32 = arith.constant 0 : i32
    %c0_i32_0 = arith.constant 0 : i32
    return %arg0, %arg1, %c0_i32 : i32, i32, i32
  }
}

</mosaic_0001>

<llo_original>
// kernel: tpu_custom_call.1
$region0: #{tpu_custom_call.1}
  #allocation0 [shape = 'u32[]', space=smem, size = 0x4, offset = 0x4, fixed_abs, tag = 'smem constant byte address 0x4 - core index']
  #allocation1 [shape = 'u32[144,128]{1,0:T(1,128)}', space=vmem, size = 0x12000, scoped, tag = 'internal scratch']
  %s0 = inlined_call_operand.hbm [shape: f32[8,2,16,128], index: 0, kind: input, shape index: {}]
  %s1 = inlined_call_operand.hbm [shape: f32[8,16,128], index: 1, kind: output, shape index: {}]
  %s2 = sld [smem:[#allocation0]]
  $region41: #{tpu_custom_call.1} parent=0
    _
  %s4 = ssub.s32 1, %s2
  %s5 = scalar_select 0, %s4, %s2
  $region1: #{tpu_custom_call.1} parent=0
    #allocation2 [shape = 'u8[131072]{0}', space=vmem, size = 0x20000, scoped, tag = 'input window, operand 0']
    #allocation3 [shape = 's32[2]{0}', space=sflag, size = 0x8, scoped, tag = 'scoped memory for tpu_custom_call.1']
    #allocation4 [shape = 's32[2]{0}', space=sflag, size = 0x8, scoped, tag = 'scoped memory for tpu_custom_call.1']
    #allocation5 [shape = 'u8[65536]{0}', space=vmem, size = 0x10000, scoped, tag = 'output window, operand 0']
    %6 = vsyncpa [#allocation3], 0
    %s7 = scalar_lea.sflag [#allocation3], 1
    %8 = vsyncpa %s7, 0
    %9 = vsyncpa [#allocation4], 0
    %s10 = scalar_lea.sflag [#allocation4], 1
    %11 = vsyncpa %s10, 0
    loop: start=0, step=1, limit=4
    $region2: #{tpu_custom_call.1} parent=1 // loop_pre_header
      _
    $region3: #{tpu_custom_call.1} parent=1 // loop_header
      %s13 = sphi 0, %s17
      %p14 = scmp.ge.s32.totalorder %s13, 4
      %s20 = sphi 0, %s32
      %s21 = sphi 0, %s28
      %s22 = sphi 0, %s20
      %s23 = sphi 0, %s21
      %s24 = sphi 0, %s22
      %s25 = sphi 0, %s23
      %s37 = sphi 0, %s39
      %s40 = sphi 0, %s37
      %s41 = sphi 0, %s40
      %s57 = sphi 0, %s41
      %s65 = sphi 0, %s67
      %s68 = sphi 0, %s65
      %s69 = sphi 0, %s68
      %s85 = sphi 0, %s69
    $region4: #{tpu_custom_call.1} parent=1 // loop_header_branch
      %16 = sbr.rel (%p14) target = $region8
    $region5: #{tpu_custom_call.1} parent=1 // loop_body
      %s18 = ssub.s32 %s13, 1
      %s19 = ssub.s32 %s13, 2
      %s26 = sadd.s32 1, %s21
      %p27 = scmp.ge.s32.totalorder %s26, 1
      %s28 = scalar_select %p27, 0, %s26
      %s29 = sadd.s32 1, %s20
      %s30 = scalar_select %p27, %s29, %s20
      %p31 = scmp.ge.s32.totalorder %s30, 2
      %s32 = scalar_select %p31, 0, %s30
      %s33 = ssub.s32 %s20, %s32
      %s34 = ssub.s32 %s21, %s28
      %s35 = sor.u32 %s33, %s34
      %p36 = scmp.eq.s32.totalorder %s35, 0
      %s38 = sadd.s32 %s37, 1
      %s39 = scalar_select %p36, %s37, %s38
      %p42 = pneg %p36
      %p43 = scmp.eq.s32.totalorder %s13, 1
      %p44 = por %p42, %p43
      %p45 = scmp.ne.s32.totalorder %s37, %s40
      %p46 = scmp.eq.s32.totalorder %s13, 0
      %p47 = por %p45, %p46
      %p48 = scmp.ne.s32.totalorder %s37, %s40
      %p49 = scmp.eq.s32.totalorder %s18, 1
      %p50 = por %p48, %p49
      %p51 = scmp.ne.s32.totalorder %s40, %s41
      %p52 = scmp.eq.s32.totalorder %s18, 0
      %p53 = por %p51, %p52
      %p54 = scmp.ne.s32.totalorder %s40, %s41
      %p55 = scmp.eq.s32.totalorder %s19, 1
      %p56 = por %p54, %p55
      %p58 = scmp.ne.s32.totalorder %s41, %s57
      %p59 = scmp.eq.s32.totalorder %s19, 0
      %p60 = por %p58, %p59
      %s61 = ssub.s32 %s20, %s32
      %s62 = ssub.s32 %s21, %s28
      %s63 = sor.u32 %s61, %s62
      %p64 = scmp.eq.s32.totalorder %s63, 0
      %s66 = sadd.s32 %s65, 1
      %s67 = scalar_select %p64, %s65, %s66
      %p70 = pneg %p64
      %p71 = scmp.eq.s32.totalorder %s13, 1
      %p72 = por %p70, %p71
      %p73 = scmp.ne.s32.totalorder %s65, %s68
      %p74 = scmp.eq.s32.totalorder %s13, 0
      %p75 = por %p73, %p74
      %p76 = scmp.ne.s32.totalorder %s65, %s68
      %p77 = scmp.eq.s32.totalorder %s18, 1
      %p78 = por %p76, %p77
      %p79 = scmp.ne.s32.totalorder %s68, %s69
      %p80 = scmp.eq.s32.totalorder %s18, 0
      %p81 = por %p79, %p80
      %p82 = scmp.ne.s32.totalorder %s68, %s69
      %p83 = scmp.eq.s32.totalorder %s19, 1
      %p84 = por %p82, %p83
      %p86 = scmp.ne.s32.totalorder %s69, %s85
      %p87 = scmp.eq.s32.totalorder %s19, 0
      %p88 = por %p86, %p87
      %p89 = scmp.le.s32.totalorder 1, %s13
      %p90 = scmp.lt.s32.totalorder %s13, 3
      %p91 = pnand %p89, %p90
      %p92 = pneg %p91
      // Predicated region
      $region9: #{tpu_custom_call.1} parent=5 // pred_check
        _
      $region10: #{tpu_custom_call.1} parent=5 // pred_check_branch
        %94 = sbr.rel (%p91) target = $region12
      $region11: #{tpu_custom_call.1} parent=5 // pred_region
        %s95 = ssub.s32 %s13, 1
      $region12: #{tpu_custom_call.1} parent=5 // pred_fallthru
        _
      %p96 = scmp.lt.s32.totalorder %s13, 2
      // Predicated region
      $region13: #{tpu_custom_call.1} parent=5 // pred_check
        %p97 = pneg %p96
      $region14: #{tpu_custom_call.1} parent=5 // pred_check_branch
        %99 = sbr.rel (%p97) target = $region16
      $region15: #{tpu_custom_call.1} parent=5 // pred_region
        // Predicated region
        $region17: #{tpu_custom_call.1} parent=15 // pred_check
          %p100 = pneg %p47
        $region18: #{tpu_custom_call.1} parent=15 // pred_check_branch
          %102 = sbr.rel (%p100) target = $region20
        $region19: #{tpu_custom_call.1} parent=15 // pred_region
          %s103 = sand.u32 %s37, 1
          %s104 = scalar_lea.sflag [#allocation3], %s103
          %s105 = sand.u32 %s37, 1
          %s106 = smul.addr %s105, 128
          %s107 = scalar_lea.vmem [#allocation2], %s106
          %s108 = smul.u32 4, %s20
          %s109 = smul.u32 2, %s21
          %s111 = ssub.s32 2048, 2048
          %112 = vsyncadd %s104, %s111
          %s113 = smul.addr %s108, 4
          %s114 = sadd.s32 %s109, %s113
          %s115 = smul.addr %s114, 128
          %s116 = scalar_lea.hbm %s0, %s115
          %s117 = sshll.u32 %s107, 4
          %s118 = int_to_ptr.vmem [resolvable:$true] %s117
          %123 = dma.hbm_to_vmem [thread:$0]  %s116, 2048, %s118, %s104, 128, 128, 8
        $region20: #{tpu_custom_call.1} parent=15 // pred_fallthru
          _
      $region16: #{tpu_custom_call.1} parent=5 // pred_fallthru
        _
      %p124 = scmp.le.s32.totalorder 1, %s13
      %p125 = scmp.lt.s32.totalorder %s13, 3
      %p126 = pnand %p124, %p125
      %p127 = pneg %p126
      // Predicated region
      $region21: #{tpu_custom_call.1} parent=5 // pred_check
        _
      $region22: #{tpu_custom_call.1} parent=5 // pred_check_branch
        %129 = sbr.rel (%p126) target = $region24
      $region23: #{tpu_custom_call.1} parent=5 // pred_region
        %s130 = ssub.s32 %s13, 1
        %s131 = sand.u32 %s40, 1
        %s132 = scalar_lea.sflag [#allocation3], %s131
        %s133 = sand.u32 %s40, 1
        %s134 = smul.addr %s133, 128
        %s135 = scalar_lea.vmem [#allocation2], %s134
        // Predicated region
        $region25: #{tpu_custom_call.1} parent=23 // pred_check
          %p136 = pneg %p53
        $region26: #{tpu_custom_call.1} parent=23 // pred_check_branch
          %138 = sbr.rel (%p136) target = $region28
        $region27: #{tpu_custom_call.1} parent=23 // pred_region
          %139 = dma.done %s132, 2048
        $region28: #{tpu_custom_call.1} parent=23 // pred_fallthru
          _
        %s140 = sand.u32 %s40, 1
        %s141 = scalar_lea.sflag [#allocation3], %s140
        %s142 = sand.u32 %s40, 1
        %s143 = smul.addr %s142, 128
        %s144 = scalar_lea.vmem [#allocation2], %s143
        %p145 = pneg %p53
        %p146 = pneg %p50
        %p147 = pneg %p81
        %p148 = pneg %p78
        %s149 = sand.u32 %s68, 1
        %s150 = scalar_lea.sflag [#allocation4], %s149
        %s151 = sand.u32 %s68, 1
        %s152 = smul.addr %s151, 64
        %s153 = scalar_lea.vmem [#allocation5], %s152
        %s154 = smul.u32 4, %s22
        %s155 = smul.u32 2, %s23
        %s156 = smul.u32 4, %s22
        %s157 = smul.u32 2, %s23
        %v158 = vld [vmem:[%s135] sm:$0xff]
        %v159 = vld [vmem:[%s135 + $0x8] sm:$0xff]
        %v160 = vld [vmem:[%s135 + $0x20] sm:$0xff]
        %v161 = vld [vmem:[%s135 + $0x28] sm:$0xff]
        %v162 = vld [vmem:[%s135 + $0x40] sm:$0xff]
        %v163 = vld [vmem:[%s135 + $0x48] sm:$0xff]
        %v164 = vld [vmem:[%s135 + $0x60] sm:$0xff]
        %v165 = vld [vmem:[%s135 + $0x68] sm:$0xff]
        %s166 = scalar_lea.vmem %s135, 16 [#allocation2]
        %v167 = vld [vmem:[%s166] sm:$0xff]
        %v168 = vld [vmem:[%s166 + $0x8] sm:$0xff]
        %v169 = vld [vmem:[%s166 + $0x20] sm:$0xff]
        %v170 = vld [vmem:[%s166 + $0x28] sm:$0xff]
        %v171 = vld [vmem:[%s166 + $0x40] sm:$0xff]
        %v172 = vld [vmem:[%s166 + $0x48] sm:$0xff]
        %v173 = vld [vmem:[%s166 + $0x60] sm:$0xff]
        %v174 = vld [vmem:[%s166 + $0x68] sm:$0xff]
        %v175 = vmul.f32 %v158, %v158
        %v176 = vmul.f32 %v159, %v159
        %v177 = vmul.f32 %v160, %v160
        %v178 = vmul.f32 %v161, %v161
        %v179 = vmul.f32 %v162, %v162
        %v180 = vmul.f32 %v163, %v163
        %v181 = vmul.f32 %v164, %v164
        %v182 = vmul.f32 %v165, %v165
        %v183 = vmul.f32 %v167, %v167
        %v184 = vmul.f32 %v168, %v168
        %v185 = vmul.f32 %v169, %v169
        %v186 = vmul.f32 %v170, %v170
        %v187 = vmul.f32 %v171, %v171
        %v188 = vmul.f32 %v172, %v172
        %v189 = vmul.f32 %v173, %v173
        %v190 = vmul.f32 %v174, %v174
        %v191 = vadd.f32 %v175, %v183
        %v192 = vadd.f32 %v176, %v184
        %v193 = vadd.f32 %v177, %v185
        %v194 = vadd.f32 %v178, %v186
        %v195 = vadd.f32 %v179, %v187
        %v196 = vadd.f32 %v180, %v188
        %v197 = vadd.f32 %v181, %v189
        %v198 = vadd.f32 %v182, %v190
        %v199 = vrsqrt.pop %v191
        %v200 = vmul.f32 %v191, %v199
        %vm201 = vcmp.eq.f32.partialorder %v191, inf
        %v202 = vsel %vm201, %v191, %v200
        %vm203 = vcmp.eq.f32.partialorder %v191, 0.0
        %v204 = vand.u32 %v191, 2147483648
        %v205 = vsel %vm203, %v204, %v202
        %v206 = vrsqrt.pop %v192
        %v207 = vmul.f32 %v192, %v206
        %vm208 = vcmp.eq.f32.partialorder %v192, inf
        %v209 = vsel %vm208, %v192, %v207
        %vm210 = vcmp.eq.f32.partialorder %v192, 0.0
        %v211 = vand.u32 %v192, 2147483648
        %v212 = vsel %vm210, %v211, %v209
        %v213 = vrsqrt.pop %v193
        %v214 = vmul.f32 %v193, %v213
        %vm215 = vcmp.eq.f32.partialorder %v193, inf
        %v216 = vsel %vm215, %v193, %v214
        %vm217 = vcmp.eq.f32.partialorder %v193, 0.0
        %v218 = vand.u32 %v193, 2147483648
        %v219 = vsel %vm217, %v218, %v216
        %v220 = vrsqrt.pop %v194
        %v221 = vmul.f32 %v194, %v220
        %vm222 = vcmp.eq.f32.partialorder %v194, inf
        %v223 = vsel %vm222, %v194, %v221
        %vm224 = vcmp.eq.f32.partialorder %v194, 0.0
        %v225 = vand.u32 %v194, 2147483648
        %v226 = vsel %vm224, %v225, %v223
        %v227 = vrsqrt.pop %v195
        %v228 = vmul.f32 %v195, %v227
        %vm229 = vcmp.eq.f32.partialorder %v195, inf
        %v230 = vsel %vm229, %v195, %v228
        %vm231 = vcmp.eq.f32.partialorder %v195, 0.0
        %v232 = vand.u32 %v195, 2147483648
        %v233 = vsel %vm231, %v232, %v230
        %v234 = vrsqrt.pop %v196
        %v235 = vmul.f32 %v196, %v234
        %vm236 = vcmp.eq.f32.partialorder %v196, inf
        %v237 = vsel %vm236, %v196, %v235
        %vm238 = vcmp.eq.f32.partialorder %v196, 0.0
        %v239 = vand.u32 %v196, 2147483648
        %v240 = vsel %vm238, %v239, %v237
        %v241 = vrsqrt.pop %v197
        %v242 = vmul.f32 %v197, %v241
        %vm243 = vcmp.eq.f32.partialorder %v197, inf
        %v244 = vsel %vm243, %v197, %v242
        %vm245 = vcmp.eq.f32.partialorder %v197, 0.0
        %v246 = vand.u32 %v197, 2147483648
        %v247 = vsel %vm245, %v246, %v244
        %v248 = vrsqrt.pop %v198
        %v249 = vmul.f32 %v198, %v248
        %vm250 = vcmp.eq.f32.partialorder %v198, inf
        %v251 = vsel %vm250, %v198, %v249
        %vm252 = vcmp.eq.f32.partialorder %v198, 0.0
        %v253 = vand.u32 %v198, 2147483648
        %v254 = vsel %vm252, %v253, %v251
        %255 = vst [vmem:[%s153] sm:$0xff] %v205
        %256 = vst [vmem:[%s153 + $0x8] sm:$0xff] %v212
        %257 = vst [vmem:[%s153 + $0x10] sm:$0xff] %v219
        %258 = vst [vmem:[%s153 + $0x18] sm:$0xff] %v226
        %259 = vst [vmem:[%s153 + $0x20] sm:$0xff] %v233
        %260 = vst [vmem:[%s153 + $0x28] sm:$0xff] %v240
        %261 = vst [vmem:[%s153 + $0x30] sm:$0xff] %v247
        %262 = vst [vmem:[%s153 + $0x38] sm:$0xff] %v254
        %s263 = sand.u32 %s68, 1
        %s264 = scalar_lea.sflag [#allocation4], %s263
        %s265 = sand.u32 %s68, 1
        %s266 = smul.addr %s265, 64
        %s267 = scalar_lea.vmem [#allocation5], %s266
        // Predicated region
        $region29: #{tpu_custom_call.1} parent=23 // pred_check
          %p268 = pneg %p78
        $region30: #{tpu_custom_call.1} parent=23 // pred_check_branch
          %270 = sbr.rel (%p268) target = $region32
        $region31: #{tpu_custom_call.1} parent=23 // pred_region
          %s271 = smul.u32 4, %s22
          %s272 = smul.u32 2, %s23
          %s274 = ssub.s32 1024, 1024
          %275 = vsyncadd %s264, %s274
          %s276 = smul.addr %s271, 2
          %s277 = sadd.s32 %s272, %s276
          %s278 = smul.addr %s277, 128
          %s279 = scalar_lea.hbm %s1, %s278
          %s280 = sshll.u32 %s267, 4
          %s281 = int_to_ptr.vmem [resolvable:$true] %s280
          %286 = dma.vmem_to_hbm [thread:$0]  %s281, 1024, %s279, %s264, 128, 128, 8
        $region32: #{tpu_custom_call.1} parent=23 // pred_fallthru
          _
      $region24: #{tpu_custom_call.1} parent=5 // pred_fallthru
        _
      %p287 = scmp.le.s32.totalorder 2, %s13
      // Predicated region
      $region33: #{tpu_custom_call.1} parent=5 // pred_check
        %p288 = pneg %p287
      $region34: #{tpu_custom_call.1} parent=5 // pred_check_branch
        %290 = sbr.rel (%p288) target = $region36
      $region35: #{tpu_custom_call.1} parent=5 // pred_region
        %s291 = ssub.s32 %s13, 2
        // Predicated region
        $region37: #{tpu_custom_call.1} parent=35 // pred_check
          %p292 = pneg %p84
        $region38: #{tpu_custom_call.1} parent=35 // pred_check_branch
          %294 = sbr.rel (%p292) target = $region40
        $region39: #{tpu_custom_call.1} parent=35 // pred_region
          %s295 = sand.u32 %s69, 1
          %s296 = scalar_lea.sflag [#allocation4], %s295
          %s297 = sand.u32 %s69, 1
          %s298 = smul.addr %s297, 64
          %s299 = scalar_lea.vmem [#allocation5], %s298
          %300 = dma.done %s296, 1024
        $region40: #{tpu_custom_call.1} parent=35 // pred_fallthru
          _
      $region36: #{tpu_custom_call.1} parent=5 // pred_fallthru
        _
    $region6: #{tpu_custom_call.1} parent=1 // loop_footer
      %s17 = sadd.s32 1, %s13
    $region7: #{tpu_custom_call.1} parent=1 // loop_footer_branch
      %12 = sbr.rel target = $region3
    $region8: #{tpu_custom_call.1} parent=1 // loop_exit
      _
    %301 = vsyncpa [#allocation3], 1
    %s302 = scalar_lea.sflag [#allocation3], 1
    %303 = vsyncpa %s302, 1
    %304 = vsyncpa [#allocation4], 1
    %s305 = scalar_lea.sflag [#allocation4], 1
    %306 = vsyncpa %s305, 1

</llo_original>
